<compile_context>
chip_gen: v7x
topology: tpu7x:2x2x1
jax: 0.10.0
libtpu: 0.0.40
codegen_flags: <defaults>
</compile_context>

<pallas_src>
import functools

import jax
import jax.numpy as jnp
from jax import lax
from jax.experimental import pallas as pl
from jax.experimental.pallas import tpu as pltpu


def _round_up(x: int, m: int) -> int:
    return (x + m - 1) // m * m


def state_encoder_kernel(obs_ref, mask_ref, w1_ref, b1_ref, w2_ref, b2_ref,
                         probs_ref, *, n_valid_actions: int):
    # Linear(D -> H) + ReLU. obs/w1 are already bf16 (cast in the wrapper);
    # the MXU accumulates in f32.
    h = jnp.dot(obs_ref[...], w1_ref[...],
                preferred_element_type=jnp.float32) + b1_ref[...]
    h = jnp.maximum(h, 0.0)

    # Linear(H -> A); bf16 operands, f32 accumulation.
    logits = jnp.dot(h.astype(jnp.bfloat16), w2_ref[...],
                     preferred_element_type=jnp.float32) + b2_ref[...]

    # logits.masked_fill(mask == 0, -1e10) on the real action lanes.
    logits = jnp.where(mask_ref[...] != 0, logits, -1e10)

    # Padded action lanes (>= n_valid_actions) are removed from the softmax
    # entirely (-inf -> exp == 0), so an all-masked row still matches PyTorch:
    # uniform 1/A over the real actions, not 1/A_padded.
    lane = lax.broadcasted_iota(jnp.int32, logits.shape, dimension=1)
    logits = jnp.where(lane < n_valid_actions, logits, -jnp.inf)

    # softmax over the lane-dense (128-padded) action axis, exact reciprocal.
    m = jnp.max(logits, axis=-1, keepdims=True)
    e = jnp.exp(logits - m)
    denom = jnp.sum(e, axis=-1, keepdims=True)
    probs_ref[...] = (e * pl.reciprocal(denom, approx=False)).astype(
        probs_ref.dtype)


def prepare_params(w1, b1, w2, b2):
    """Pad/cast the static Linear parameters ONCE (outside the per-call jit):
    bf16 MXU-resident weights, f32 biases, all lane dims padded to 128."""
    D_in, H = w1.shape
    A = w2.shape[1]
    D_p, H_p, A_p = _round_up(D_in, 128), _round_up(H, 128), _round_up(A, 128)
    bf16, f32 = jnp.bfloat16, jnp.float32
    w1_p = jnp.zeros((D_p, H_p), bf16).at[:D_in, :H].set(w1.astype(bf16))
    b1_p = jnp.zeros((1, H_p), f32).at[:, :H].set(
        jnp.reshape(b1, (1, H)).astype(f32))
    w2_p = jnp.zeros((H_p, A_p), bf16).at[:H, :A].set(w2.astype(bf16))
    b2_p = jnp.zeros((1, A_p), f32).at[:, :A].set(
        jnp.reshape(b2, (1, A)).astype(f32))
    return w1_p, b1_p, w2_p, b2_p


@functools.partial(jax.jit, static_argnames=("block_b",))
def state_encoder_forward(obs, action_mask, w1_p, b1_p, w2_p, b2_p, *,
                          block_b=1024):
    """Returns (probs, state). `state` (recurrent state) is None, as in the
    PyTorch module when the preprocess net is a plain MLP."""
    B, D_in = obs.shape
    A = action_mask.shape[1]
    D_p, H_p = w1_p.shape
    H_p2, A_p = w2_p.shape
    assert H_p == H_p2 and D_p >= D_in and A_p >= A

    # Batch tile: multiple of 16 (bf16 sublane packing); keep >=2 grid steps
    # when the batch allows, so "parallel" sharding uses both v7x TensorCores.
    ALIGN = 16
    block_b = _round_up(block_b, ALIGN)
    B_a = _round_up(B, ALIGN)
    tb_cap = _round_up(max(B_a // 2, ALIGN), ALIGN)
    tb = min(block_b, tb_cap)
    B_p = _round_up(B_a, tb)

    bf16 = jnp.bfloat16
    obs_p = jnp.zeros((B_p, D_p), bf16).at[:B, :D_in].set(obs.astype(bf16))
    mask_p = jnp.zeros((B_p, A_p), bf16).at[:B, :A].set(
        action_mask.astype(bf16))

    batch_spec = lambda lanes: pl.BlockSpec((tb, lanes), lambda i: (i, 0))
    resident = lambda shape: pl.BlockSpec(shape, lambda i: (0, 0))

    kernel = functools.partial(state_encoder_kernel, n_valid_actions=A)

    probs_p = pl.pallas_call(
        kernel,
        out_shape=jax.ShapeDtypeStruct((B_p, A_p), jnp.float32),
        grid=(B_p // tb,),
        in_specs=[
            batch_spec(D_p),          # obs features (bf16, batch-tiled)
            batch_spec(A_p),          # action mask (bf16, batch-tiled)
            resident((D_p, H_p)),     # layer-1 weight (bf16, VMEM-resident)
            resident((1, H_p)),       # layer-1 bias (f32)
            resident((H_p, A_p)),     # layer-2 weight (bf16, VMEM-resident)
            resident((1, A_p)),       # layer-2 bias (f32)
        ],
        out_specs=batch_spec(A_p),    # lane-dense probs (f32)
        compiler_params=pltpu.CompilerParams(
            dimension_semantics=("parallel",),
            vmem_limit_bytes=48 * 1024 * 1024,
        ),
    )(obs_p, mask_p, w1_p, b1_p, w2_p, b2_p)

    return probs_p[:B, :A], None


def init_params(key, d_in, hidden, n_actions):
    # PyTorch nn.Linear-style init: U(-1/sqrt(fan_in), 1/sqrt(fan_in))
    k1, k2, k3, k4 = jax.random.split(key, 4)
    lim1 = 1.0 / (d_in ** 0.5)
    lim2 = 1.0 / (hidden ** 0.5)
    w1 = jax.random.uniform(k1, (d_in, hidden), jnp.float32, -lim1, lim1)
    b1 = jax.random.uniform(k2, (1, hidden), jnp.float32, -lim1, lim1)
    w2 = jax.random.uniform(k3, (hidden, n_actions), jnp.float32, -lim2, lim2)
    b2 = jax.random.uniform(k4, (1, n_actions), jnp.float32, -lim2, lim2)
    return w1, b1, w2, b2


if __name__ == "__main__":
    key = jax.random.PRNGKey(0)
    k_obs, k_mask, k_par = jax.random.split(key, 3)

    batch, obs_dim, hidden, n_actions = 8, 32, 64, 16

    obs = jax.random.normal(k_obs, (batch, obs_dim), jnp.float32)
    # binary action mask (obs.mask in the PyTorch module)
    action_mask = (jax.random.uniform(k_mask, (batch, n_actions)) > 0.3
                   ).astype(jnp.float32)
    action_mask = action_mask.at[:, 0].set(1.0)   # most rows: >=1 valid action
    action_mask = action_mask.at[-1, :].set(0.0)  # all-masked edge-case row

    w1, b1, w2, b2 = init_params(k_par, obs_dim, hidden, n_actions)
    params_p = prepare_params(w1, b1, w2, b2)     # pad/cast weights ONCE

    probs, state = state_encoder_forward(obs, action_mask, *params_p)
    jax.block_until_ready(probs)

    # pure-JAX f32 reference (matches the PyTorch tail exactly)
    h_ref = jnp.maximum(obs @ w1 + b1, 0.0)
    logits_ref = jnp.where(action_mask != 0, h_ref @ w2 + b2, -1e10)
    probs_ref = jax.nn.softmax(logits_ref, axis=-1)

    assert probs.shape == (batch, n_actions)
    assert state is None
    # rows sum to 1 (exact reciprocal now)
    row_sums = jnp.sum(probs, axis=-1)
    assert bool(jnp.all(jnp.abs(row_sums - 1.0) < 1e-3))
    # masked actions get ~zero probability (in rows with >=1 valid action)
    has_valid = jnp.any(action_mask != 0, axis=-1, keepdims=True)
    masked_probs = jnp.where((action_mask == 0) & has_valid, probs, 0.0)
    assert bool(jnp.max(masked_probs) < 1e-6)
    # all-masked row -> uniform 1/A over real actions, as in PyTorch
    assert bool(jnp.max(jnp.abs(probs[-1] - 1.0 / n_actions)) < 1e-3)
    # close to the f32 reference despite bf16 MXU operands
    assert bool(jnp.max(jnp.abs(probs - probs_ref)) < 5e-2)

    print("KERNEL_OK")
</pallas_src>

<mosaic_0001>
module attributes {stable_mosaic.version = 11 : i64} {
  func.func @state_encoder_kernel(%arg0: i32, %arg1: memref<16x128xbf16, #tpu.memory_space<vmem>>, %arg2: memref<16x128xbf16, #tpu.memory_space<vmem>>, %arg3: memref<128x128xbf16, #tpu.memory_space<vmem>>, %arg4: memref<1x128xf32, #tpu.memory_space<vmem>>, %arg5: memref<128x128xbf16, #tpu.memory_space<vmem>>, %arg6: memref<1x128xf32, #tpu.memory_space<vmem>>, %arg7: memref<16x128xf32, #tpu.memory_space<vmem>>) attributes {dimension_semantics = [#tpu.dimension_semantics<parallel>], iteration_bounds = array<i64: 1>, scalar_prefetch = 0 : i64, scratch_operands = 0 : i64, tpu.core_type = #tpu.core_type<tc>, window_params = [{transform_indices = @transform_0, window_bounds = array<i64: 16, 128>}, {transform_indices = @transform_1, window_bounds = array<i64: 16, 128>}, {pipeline_mode = #tpu.pipeline_mode<synchronous>, transform_indices = @transform_2, window_bounds = array<i64: 128, 128>}, {pipeline_mode = #tpu.pipeline_mode<synchronous>, transform_indices = @transform_3, window_bounds = array<i64: 1, 128>}, {pipeline_mode = #tpu.pipeline_mode<synchronous>, transform_indices = @transform_4, window_bounds = array<i64: 128, 128>}, {pipeline_mode = #tpu.pipeline_mode<synchronous>, transform_indices = @transform_5, window_bounds = array<i64: 1, 128>}, {transform_indices = @transform_6, window_bounds = array<i64: 16, 128>}]} {
    %c0 = arith.constant 0 : index
    %c0_0 = arith.constant 0 : index
    %0 = vector.load %arg1[%c0, %c0_0] : memref<16x128xbf16, #tpu.memory_space<vmem>>, vector<16x128xbf16>
    %c0_1 = arith.constant 0 : index
    %c0_2 = arith.constant 0 : index
    %1 = vector.load %arg3[%c0_1, %c0_2] : memref<128x128xbf16, #tpu.memory_space<vmem>>, vector<128x128xbf16>
    %cst = arith.constant dense<0.000000e+00> : vector<16x128xf32>
    %2 = tpu.matmul %0, %1, %cst {dimension_numbers = #tpu.dot_dimension_numbers<[1], [0], [0], [1], [0, 0, 1, 1], [], []>} : vector<16x128xbf16>, vector<128x128xbf16>, vector<16x128xf32> -> vector<16x128xf32>
    %c0_3 = arith.constant 0 : index
    %c0_4 = arith.constant 0 : index
    %3 = vector.load %arg4[%c0_3, %c0_4] : memref<1x128xf32, #tpu.memory_space<vmem>>, vector<1x128xf32>
    %4 = vector.broadcast %3 : vector<1x128xf32> to vector<16x128xf32>
    %5 = arith.addf %2, %4 : vector<16x128xf32>
    %cst_5 = arith.constant 0.000000e+00 : f32
    %6 = vector.broadcast %cst_5 : f32 to vector<16x128xf32>
    %7 = arith.maximumf %5, %6 : vector<16x128xf32>
    %8 = arith.truncf %7 : vector<16x128xf32> to vector<16x128xbf16>
    %c0_6 = arith.constant 0 : index
    %c0_7 = arith.constant 0 : index
    %9 = vector.load %arg5[%c0_6, %c0_7] : memref<128x128xbf16, #tpu.memory_space<vmem>>, vector<128x128xbf16>
    %cst_8 = arith.constant dense<0.000000e+00> : vector<16x128xf32>
    %10 = tpu.matmul %8, %9, %cst_8 {dimension_numbers = #tpu.dot_dimension_numbers<[1], [0], [0], [1], [0, 0, 1, 1], [], []>} : vector<16x128xbf16>, vector<128x128xbf16>, vector<16x128xf32> -> vector<16x128xf32>
    %c0_9 = arith.constant 0 : index
    %c0_10 = arith.constant 0 : index
    %11 = vector.load %arg6[%c0_9, %c0_10] : memref<1x128xf32, #tpu.memory_space<vmem>>, vector<1x128xf32>
    %12 = vector.broadcast %11 : vector<1x128xf32> to vector<16x128xf32>
    %13 = arith.addf %10, %12 : vector<16x128xf32>
    %c0_11 = arith.constant 0 : index
    %c0_12 = arith.constant 0 : index
    %14 = vector.load %arg2[%c0_11, %c0_12] : memref<16x128xbf16, #tpu.memory_space<vmem>>, vector<16x128xbf16>
    %cst_13 = arith.constant 0.000000e+00 : bf16
    %15 = vector.broadcast %cst_13 : bf16 to vector<16x128xbf16>
    %16 = arith.cmpf one, %14, %15 : vector<16x128xbf16>
    %cst_14 = arith.constant -1.000000e+10 : f32
    %17 = vector.broadcast %cst_14 : f32 to vector<16x128xf32>
    %18 = arith.select %16, %13, %17 : vector<16x128xi1>, vector<16x128xf32>
    %19 = tpu.iota {dimensions = array<i32: 1>} : vector<16x128xi32>
    %c16_i32 = arith.constant 16 : i32
    %20 = vector.broadcast %c16_i32 : i32 to vector<16x128xi32>
    %21 = arith.cmpi slt, %19, %20 : vector<16x128xi32>
    %cst_15 = arith.constant 0xFF800000 : f32
    %22 = vector.broadcast %cst_15 : f32 to vector<16x128xf32>
    %23 = arith.select %21, %18, %22 : vector<16x128xi1>, vector<16x128xf32>
    %cst_16 = arith.constant dense<0xFF800000> : vector<16xf32>
    %24 = vector.multi_reduction <maximumf>, %23, %cst_16 [1] : vector<16x128xf32> to vector<16xf32>
    %25 = vector.shape_cast %24 : vector<16xf32> to vector<16x1xf32>
    %26 = vector.broadcast %25 : vector<16x1xf32> to vector<16x128xf32>
    %27 = arith.subf %23, %26 : vector<16x128xf32>
    %28 = math.exp %27 : vector<16x128xf32>
    %cst_17 = arith.constant dense<0.000000e+00> : vector<16xf32>
    %29 = vector.multi_reduction <add>, %28, %cst_17 [1] : vector<16x128xf32> to vector<16xf32>
    %30 = vector.shape_cast %29 : vector<16xf32> to vector<16x1xf32>
    %31 = tpu.reciprocal %30 : vector<16x1xf32> -> vector<16x1xf32>
    %32 = vector.broadcast %31 : vector<16x1xf32> to vector<16x128xf32>
    %33 = arith.mulf %28, %32 : vector<16x128xf32>
    %c0_18 = arith.constant 0 : index
    %c0_19 = arith.constant 0 : index
    %34 = vector.load %arg7[%c0_18, %c0_19] : memref<16x128xf32, #tpu.memory_space<vmem>>, vector<16x128xf32>
    tpu.vector_store %arg7[%c0_18, %c0_19], %33 {strides = array<i32>} : memref<16x128xf32, #tpu.memory_space<vmem>>, vector<16x128xf32>,
    return
  }
  func.func @transform_0(%arg0: i32) -> (i32, i32) {
    %c0_i32 = arith.constant 0 : i32
    %c0_i32_0 = arith.constant 0 : i32
    return %arg0, %c0_i32 : i32, i32
  }
  func.func @transform_1(%arg0: i32) -> (i32, i32) {
    %c0_i32 = arith.constant 0 : i32
    %c0_i32_0 = arith.constant 0 : i32
    return %arg0, %c0_i32 : i32, i32
  }
  func.func @transform_2(%arg0: i32) -> (i32, i32) {
    %c0_i32 = arith.constant 0 : i32
    %c0_i32_0 = arith.constant 0 : i32
    %c0_i32_1 = arith.constant 0 : i32
    return %c0_i32, %c0_i32_0 : i32, i32
  }
  func.func @transform_3(%arg0: i32) -> (i32, i32) {
    %c0_i32 = arith.constant 0 : i32
    %c0_i32_0 = arith.constant 0 : i32
    %c0_i32_1 = arith.constant 0 : i32
    return %c0_i32, %c0_i32_0 : i32, i32
  }
  func.func @transform_4(%arg0: i32) -> (i32, i32) {
    %c0_i32 = arith.constant 0 : i32
    %c0_i32_0 = arith.constant 0 : i32
    %c0_i32_1 = arith.constant 0 : i32
    return %c0_i32, %c0_i32_0 : i32, i32
  }
  func.func @transform_5(%arg0: i32) -> (i32, i32) {
    %c0_i32 = arith.constant 0 : i32
    %c0_i32_0 = arith.constant 0 : i32
    %c0_i32_1 = arith.constant 0 : i32
    return %c0_i32, %c0_i32_0 : i32, i32
  }
  func.func @transform_6(%arg0: i32) -> (i32, i32) {
    %c0_i32 = arith.constant 0 : i32
    %c0_i32_0 = arith.constant 0 : i32
    return %arg0, %c0_i32 : i32, i32
  }
}

</mosaic_0001>

<llo_original>
// kernel: state_encoder_forward.1
$region0: #{state_encoder_forward.1}
  #allocation0 [shape = 'u32[]', space=smem, size = 0x4, offset = 0x4, fixed_abs, tag = 'smem constant byte address 0x4 - core index']
  #allocation1 [shape = 'u32[144,128]{1,0:T(1,128)}', space=vmem, size = 0x12000, scoped, tag = 'internal scratch']
  %s0 = inlined_call_operand.vmem [shape: bf16[16,128], index: 0, kind: input, shape index: {}]
  %s1 = inlined_call_operand.vmem [shape: bf16[16,128], index: 1, kind: input, shape index: {}]
  %s2 = inlined_call_operand.hbm [shape: bf16[128,128], index: 2, kind: input, shape index: {}]
  %s3 = inlined_call_operand.vmem [shape: f32[1,128], index: 3, kind: input, shape index: {}]
  %s4 = inlined_call_operand.vmem [shape: bf16[128,128], index: 4, kind: input, shape index: {}]
  %s5 = inlined_call_operand.vmem [shape: f32[1,128], index: 5, kind: input, shape index: {}]
  %s6 = inlined_call_operand.vmem [shape: f32[16,128], index: 6, kind: output, shape index: {}]
  %s7 = sld [smem:[#allocation0]]
  $region38: #{state_encoder_forward.1} parent=0
    _
  %s9 = ssub.s32 1, %s7
  %s10 = scalar_select 0, %s9, %s7
  $region1: #{state_encoder_forward.1} parent=0
    #allocation2 [shape = 'u8[32768]{0}', space=vmem, size = 0x8000, scoped, tag = 'input window, operand 2, single buffered']
    #allocation3 [shape = 's32[1]{0}', space=sflag, size = 0x4, scoped, tag = 'scoped memory for state_encoder_forward.1']
    %11 = vsyncpa [#allocation3], 0
    // Predicated region
    $region2: #{state_encoder_forward.1} parent=1 // pred_check
      _
    $region3: #{state_encoder_forward.1} parent=1 // pred_check_branch
      %13 = sbr.rel (0) target = $region5
    $region4: #{state_encoder_forward.1} parent=1 // pred_region
      _
    $region5: #{state_encoder_forward.1} parent=1 // pred_fallthru
      _
    // Predicated region
    $region6: #{state_encoder_forward.1} parent=1 // pred_check
      _
    $region7: #{state_encoder_forward.1} parent=1 // pred_check_branch
      %15 = sbr.rel (0) target = $region9
    $region8: #{state_encoder_forward.1} parent=1 // pred_region
      _
    $region9: #{state_encoder_forward.1} parent=1 // pred_fallthru
      _
    // Predicated region
    $region10: #{state_encoder_forward.1} parent=1 // pred_check
      _
    $region11: #{state_encoder_forward.1} parent=1 // pred_check_branch
      %17 = sbr.rel (0) target = $region13
    $region12: #{state_encoder_forward.1} parent=1 // pred_region
      %s19 = ssub.s32 1024, 1024
      %20 = vsyncadd [#allocation3], %s19
      %s21 = sshll.u32 [#allocation2], 4
      %s22 = int_to_ptr.vmem [resolvable:$true] %s21
      %27 = dma.hbm_to_vmem [thread:$0]  %s2, 1024, %s22, [#allocation3], 64, 64, 4
    $region13: #{state_encoder_forward.1} parent=1 // pred_fallthru
      _
    // Predicated region
    $region14: #{state_encoder_forward.1} parent=1 // pred_check
      _
    $region15: #{state_encoder_forward.1} parent=1 // pred_check_branch
      %29 = sbr.rel (0) target = $region17
    $region16: #{state_encoder_forward.1} parent=1 // pred_region
      _
    $region17: #{state_encoder_forward.1} parent=1 // pred_fallthru
      _
    // Predicated region
    $region18: #{state_encoder_forward.1} parent=1 // pred_check
      _
    $region19: #{state_encoder_forward.1} parent=1 // pred_check_branch
      %31 = sbr.rel (0) target = $region21
    $region20: #{state_encoder_forward.1} parent=1 // pred_region
      _
    $region21: #{state_encoder_forward.1} parent=1 // pred_fallthru
      _
    // Predicated region
    $region22: #{state_encoder_forward.1} parent=1 // pred_check
      _
    $region23: #{state_encoder_forward.1} parent=1 // pred_check_branch
      %33 = sbr.rel (0) target = $region25
    $region24: #{state_encoder_forward.1} parent=1 // pred_region
      _
    $region25: #{state_encoder_forward.1} parent=1 // pred_fallthru
      _
    // Predicated region
    $region26: #{state_encoder_forward.1} parent=1 // pred_check
      _
    $region27: #{state_encoder_forward.1} parent=1 // pred_check_branch
      %35 = sbr.rel (0) target = $region29
    $region28: #{state_encoder_forward.1} parent=1 // pred_region
      %36 = dma.done [#allocation3], 1024
    $region29: #{state_encoder_forward.1} parent=1 // pred_fallthru
      _
    %v40 = vld [vmem:[%s0] sm:$0xf]
    %v41 = vld [vmem:[%s0 + $0x4] sm:$0xf]
    %v42 = vld [vmem:[#allocation2] sm:$0xf]
    %v43 = vld [vmem:[#allocation2 + $0x4] sm:$0xf]
    %v44 = vld [vmem:[#allocation2 + $0x8] sm:$0xf]
    %v45 = vld [vmem:[#allocation2 + $0xc] sm:$0xf]
    %v46 = vld [vmem:[#allocation2 + $0x10] sm:$0xf]
    %v47 = vld [vmem:[#allocation2 + $0x14] sm:$0xf]
    %v48 = vld [vmem:[#allocation2 + $0x18] sm:$0xf]
    %v49 = vld [vmem:[#allocation2 + $0x1c] sm:$0xf]
    %v50 = vld [vmem:[#allocation2 + $0x20] sm:$0xf]
    %v51 = vld [vmem:[#allocation2 + $0x24] sm:$0xf]
    %v52 = vld [vmem:[#allocation2 + $0x28] sm:$0xf]
    %v53 = vld [vmem:[#allocation2 + $0x2c] sm:$0xf]
    %v54 = vld [vmem:[#allocation2 + $0x30] sm:$0xf]
    %v55 = vld [vmem:[#allocation2 + $0x34] sm:$0xf]
    %v56 = vld [vmem:[#allocation2 + $0x38] sm:$0xf]
    %v57 = vld [vmem:[#allocation2 + $0x3c] sm:$0xf]
    %v58 = vld [vmem:[%s3] sm:$0x1]
    %v60 = vlaneseq
    %v61 = vshrl.u32 %v60, 7
    %v62 = vsub.s32 0, %v61
    %v63 = vrot.slane %v58, %v62
    %v67 = vunpack.c.l.b16 %v40
    %v68 = vunpack.c.l.b16 %v41
    %v69 = vpack.c.b16 %v68, %v67
    %v87 = vunpack.c.l.b16 %v42
    %v88 = vunpack.c.l.b16 %v43
    %v89 = vunpack.c.l.b16 %v44
    %v90 = vunpack.c.l.b16 %v45
    %v91 = vunpack.c.l.b16 %v46
    %v92 = vunpack.c.l.b16 %v47
    %v93 = vunpack.c.l.b16 %v48
    %v94 = vunpack.c.l.b16 %v49
    %v95 = vunpack.c.l.b16 %v50
    %v96 = vunpack.c.l.b16 %v51
    %v97 = vunpack.c.l.b16 %v52
    %v98 = vunpack.c.l.b16 %v53
    %v99 = vunpack.c.l.b16 %v54
    %v100 = vunpack.c.l.b16 %v55
    %v101 = vunpack.c.l.b16 %v56
    %v102 = vunpack.c.l.b16 %v57
    %v103 = vpack.c.b16 %v88, %v87
    %v104 = vpack.c.b16 %v90, %v89
    %v105 = vpack.c.b16 %v92, %v91
    %v106 = vpack.c.b16 %v94, %v93
    %v107 = vpack.c.b16 %v96, %v95
    %v108 = vpack.c.b16 %v98, %v97
    %v109 = vpack.c.b16 %v100, %v99
    %v110 = vpack.c.b16 %v102, %v101
    %119 = vmatprep.subr.bf16.mxu0 0
    %120 = vmatpush1.bf16.msra.mxu0 %v103
    %121 = vmatprep.subr.bf16.mxu0 0
    %122 = vmatpush1.bf16.msra.mxu0 %v104
    %123 = vmatprep.subr.bf16.mxu0 0
    %124 = vmatpush1.bf16.msra.mxu0 %v105
    %125 = vmatprep.subr.bf16.mxu0 0
    %126 = vmatpush1.bf16.msra.mxu0 %v106
    %127 = vmatprep.subr.bf16.mxu0 0
    %128 = vmatpush1.bf16.msra.mxu0 %v107
    %129 = vmatprep.subr.bf16.mxu0 0
    %130 = vmatpush1.bf16.msra.mxu0 %v108
    %131 = vmatprep.subr.bf16.mxu0 0
    %132 = vmatpush1.bf16.msra.mxu0 %v109
    %133 = vmatprep.subr.bf16.mxu0 0
    %134 = vmatpush1.bf16.msra.mxu0 %v110
    %135 = vmatprep.subr.bf16.mxu0 0
    %136 = vmatpush1.bf16.msra.mxu0 0
    %137 = vmatprep.subr.bf16.mxu0 0
    %138 = vmatpush1.bf16.msra.mxu0 0
    %139 = vmatprep.subr.bf16.mxu0 0
    %140 = vmatpush1.bf16.msra.mxu0 0
    %141 = vmatprep.subr.bf16.mxu0 0
    %142 = vmatpush1.bf16.msra.mxu0 0
    %143 = vmatprep.subr.bf16.mxu0 0
    %144 = vmatpush1.bf16.msra.mxu0 0
    %145 = vmatprep.subr.bf16.mxu0 0
    %146 = vmatpush1.bf16.msra.mxu0 0
    %147 = vmatprep.subr.bf16.mxu0 0
    %148 = vmatpush1.bf16.msra.mxu0 0
    %149 = vmatprep.subr.bf16.mxu0 0
    %150 = vmatpush1.bf16.msra.mxu0 0
    %151 = vmatprep.mubr.bf16.mxu0 0
    %152 = vmatmul.mubr.bf16.gmra.mrb[0].mxu0 %v69
    %v153 = vpop.f32.mrb[0].mxu0
    %v154 = vadd.f32 %v63, %v153
    %v155 = vpop.f32.mrb[0].mxu0
    %v156 = vpop.f32.mrb[0].mxu0
    %v157 = vadd.f32 %v63, %v156
    %v158 = vpop.f32.mrb[0].mxu0
    %159 = vdwg.mxu0
    %v160 = vmax.f32 %v154, 0.0
    %v161 = vmax.f32 %v157, 0.0
    %v162 = vpack.c.bf16 %v161, %v160
    %v163 = vld [vmem:[%s4] sm:$0xf]
    %v164 = vld [vmem:[%s4 + $0x4] sm:$0xf]
    %v165 = vld [vmem:[%s4 + $0x8] sm:$0xf]
    %v166 = vld [vmem:[%s4 + $0xc] sm:$0xf]
    %v167 = vld [vmem:[%s4 + $0x10] sm:$0xf]
    %v168 = vld [vmem:[%s4 + $0x14] sm:$0xf]
    %v169 = vld [vmem:[%s4 + $0x18] sm:$0xf]
    %v170 = vld [vmem:[%s4 + $0x1c] sm:$0xf]
    %v171 = vld [vmem:[%s4 + $0x20] sm:$0xf]
    %v172 = vld [vmem:[%s4 + $0x24] sm:$0xf]
    %v173 = vld [vmem:[%s4 + $0x28] sm:$0xf]
    %v174 = vld [vmem:[%s4 + $0x2c] sm:$0xf]
    %v175 = vld [vmem:[%s4 + $0x30] sm:$0xf]
    %v176 = vld [vmem:[%s4 + $0x34] sm:$0xf]
    %v177 = vld [vmem:[%s4 + $0x38] sm:$0xf]
    %v178 = vld [vmem:[%s4 + $0x3c] sm:$0xf]
    %v179 = vld [vmem:[%s5] sm:$0x1]
    %v181 = vlaneseq
    %v182 = vshrl.u32 %v181, 7
    %v183 = vsub.s32 0, %v182
    %v184 = vrot.slane %v179, %v183
    %v202 = vunpack.c.l.b16 %v163
    %v203 = vunpack.c.l.b16 %v164
    %v204 = vunpack.c.l.b16 %v165
    %v205 = vunpack.c.l.b16 %v166
    %v206 = vunpack.c.l.b16 %v167
    %v207 = vunpack.c.l.b16 %v168
    %v208 = vunpack.c.l.b16 %v169
    %v209 = vunpack.c.l.b16 %v170
    %v210 = vunpack.c.l.b16 %v171
    %v211 = vunpack.c.l.b16 %v172
    %v212 = vunpack.c.l.b16 %v173
    %v213 = vunpack.c.l.b16 %v174
    %v214 = vunpack.c.l.b16 %v175
    %v215 = vunpack.c.l.b16 %v176
    %v216 = vunpack.c.l.b16 %v177
    %v217 = vunpack.c.l.b16 %v178
    %v218 = vpack.c.b16 %v203, %v202
    %v219 = vpack.c.b16 %v205, %v204
    %v220 = vpack.c.b16 %v207, %v206
    %v221 = vpack.c.b16 %v209, %v208
    %v222 = vpack.c.b16 %v211, %v210
    %v223 = vpack.c.b16 %v213, %v212
    %v224 = vpack.c.b16 %v215, %v214
    %v225 = vpack.c.b16 %v217, %v216
    %234 = vmatprep.subr.bf16.mxu0 0
    %235 = vmatpush1.bf16.msra.mxu0 %v218
    %236 = vmatprep.subr.bf16.mxu0 0
    %237 = vmatpush1.bf16.msra.mxu0 %v219
    %238 = vmatprep.subr.bf16.mxu0 0
    %239 = vmatpush1.bf16.msra.mxu0 %v220
    %240 = vmatprep.subr.bf16.mxu0 0
    %241 = vmatpush1.bf16.msra.mxu0 %v221
    %242 = vmatprep.subr.bf16.mxu0 0
    %243 = vmatpush1.bf16.msra.mxu0 %v222
    %244 = vmatprep.subr.bf16.mxu0 0
    %245 = vmatpush1.bf16.msra.mxu0 %v223
    %246 = vmatprep.subr.bf16.mxu0 0
    %247 = vmatpush1.bf16.msra.mxu0 %v224
    %248 = vmatprep.subr.bf16.mxu0 0
    %249 = vmatpush1.bf16.msra.mxu0 %v225
    %250 = vmatprep.subr.bf16.mxu0 0
    %251 = vmatpush1.bf16.msra.mxu0 0
    %252 = vmatprep.subr.bf16.mxu0 0
    %253 = vmatpush1.bf16.msra.mxu0 0
    %254 = vmatprep.subr.bf16.mxu0 0
    %255 = vmatpush1.bf16.msra.mxu0 0
    %256 = vmatprep.subr.bf16.mxu0 0
    %257 = vmatpush1.bf16.msra.mxu0 0
    %258 = vmatprep.subr.bf16.mxu0 0
    %259 = vmatpush1.bf16.msra.mxu0 0
    %260 = vmatprep.subr.bf16.mxu0 0
    %261 = vmatpush1.bf16.msra.mxu0 0
    %262 = vmatprep.subr.bf16.mxu0 0
    %263 = vmatpush1.bf16.msra.mxu0 0
    %264 = vmatprep.subr.bf16.mxu0 0
    %265 = vmatpush1.bf16.msra.mxu0 0
    %266 = vmatprep.mubr.bf16.mxu0 0
    %267 = vmatmul.mubr.bf16.gmra.mrb[0].mxu0 %v162
    %v268 = vpop.f32.mrb[0].mxu0
    %v269 = vadd.f32 %v184, %v268
    %v270 = vpop.f32.mrb[0].mxu0
    %v271 = vpop.f32.mrb[0].mxu0
    %v272 = vadd.f32 %v184, %v271
    %v273 = vpop.f32.mrb[0].mxu0
    %274 = vdwg.mxu0
    %v275 = vld [vmem:[%s1] sm:$0xf]
    %v276 = vld [vmem:[%s1 + $0x4] sm:$0xf]
    %vm277 = vcmp.ne.bf16.partialorder %v275, 0
    %vm278 = vcmp.ne.bf16.partialorder %v276, 0
    %v279 = vsel %vm277, 65537, 0
    %v280 = vsel %vm278, 65537, 0
    %v281 = vunpack.c.l.b16 %v279
    %v282 = vunpack.c.l.b16 %v280
    %vm283 = vcmp.ne.s32.totalorder %v281, 0
    %vm284 = vcmp.ne.s32.totalorder %v282, 0
    %v285 = vsel %vm283, %v269, -1e+10
    %v286 = vsel %vm284, %v272, -1e+10
    %v287 = vlaneseq
    %v288 = vand.u32 %v287, 127
    %vm289 = vcmp.lt.s32.totalorder %v288, 16
    %v290 = vsel %vm289, %v285, -inf
    %v291 = vsel %vm289, %v286, -inf
    %292 = vmax.xlane.f32.xlu0 %v290
    %v293 = vpop.xlane.xlu0 %292
    %294 = vmax.xlane.f32.xlu0 %v291
    %v295 = vpop.xlane.xlu0 %294
    %v296 = vsub.f32 %v290, %v293
    %v297 = vsub.f32 %v291, %v295
    %v298 = vmul.f32 %v296, 1.442695
    %v299 = vpow.pop %v298
    %v300 = vmul.f32 %v297, 1.442695
    %v301 = vpow.pop %v300
    %302 = vadd.xlane.f32.xlu0 %v299
    %v303 = vpop.xlane.xlu0 %302
    %304 = vadd.xlane.f32.xlu0 %v301
    %v305 = vpop.xlane.xlu0 %304
    %v306 = vrcp.pop %v303
    %v307 = vrcp.pop %v305
    %v308 = vmul.f32 %v299, %v306
    %v309 = vmul.f32 %v301, %v307
    %310 = vst [vmem:[%s6] sm:$0xff] %v308
    %311 = vst [vmem:[%s6 + $0x8] sm:$0xff] %v309
    // Predicated region
    $region30: #{state_encoder_forward.1} parent=1 // pred_check
      _
    $region31: #{state_encoder_forward.1} parent=1 // pred_check_branch
      %313 = sbr.rel (0) target = $region33
    $region32: #{state_encoder_forward.1} parent=1 // pred_region
      _
    $region33: #{state_encoder_forward.1} parent=1 // pred_fallthru
      _
    // Predicated region
    $region34: #{state_encoder_forward.1} parent=1 // pred_check
      _
    $region35: #{state_encoder_forward.1} parent=1 // pred_check_branch
      %315 = sbr.rel (0) target = $region37
    $region36: #{state_encoder_forward.1} parent=1 // pred_region
      _
    $region37: #{state_encoder_forward.1} parent=1 // pred_fallthru
      _
    %316 = vsyncpa [#allocation3], 1

</llo_original>
